<compile_context>
chip_gen: v7x
topology: tpu7x:2x2x1
jax: 0.10.0
libtpu: 0.0.40
codegen_flags: <defaults>
</compile_context>

<pallas_src>
import functools

import jax
import jax.numpy as jnp
from jax.experimental import pallas as pl
from jax.experimental.pallas import tpu as pltpu

_SELU_ALPHA = 1.6732632423543772
_SELU_SCALE = 1.0507009873554805


def _round_up(x, m):
    return ((x + m - 1) // m) * m


def _cdiv(a, b):
    return -(-a // b)


def _pad2(a, shape):
    """Zero-pad a 2-D array up to `shape` (no-op, no copy, if already there)."""
    pads = [(0, s - d) for d, s in zip(a.shape, shape)]
    if all(p == (0, 0) for p in pads):
        return a
    return jnp.pad(a, pads)


def _activation(v, smooth):
    if smooth:
        # SELU with torch's default constants; SELU(0) = 0 keeps zero padding inert.
        return _SELU_SCALE * jnp.where(v > 0, v, _SELU_ALPHA * (jnp.exp(v) - 1.0))
    return jnp.maximum(v, 0.0)


def _mlp_kernel(x_ref, w1_ref, b1_ref, w2_ref, b2_ref, w3_ref, b3_ref, out_ref,
                *, smooth):
    """Fused 3-layer MLP: act(xW1+b1) -> act(.W2+b2) -> .W3+b3 (logits).

    Matmuls run on the MXU with f32 accumulation; the x -> operand-dtype cast,
    bias-add and activation run on the VPU (which has slack) in f32.
    """
    x = x_ref[...].astype(w1_ref.dtype)            # in-kernel cast (no wrapper pass)
    h1 = jnp.dot(x, w1_ref[...], preferred_element_type=jnp.float32) + b1_ref[...]
    h1 = _activation(h1, smooth)
    h2 = jnp.dot(h1.astype(w2_ref.dtype), w2_ref[...],
                 preferred_element_type=jnp.float32) + b2_ref[...]
    h2 = _activation(h2, smooth)
    # TODO(synk): F.dropout(p, training=True) not implemented; eval-mode
    # (identity) forward semantics are reproduced here.
    logits = jnp.dot(h2.astype(w3_ref.dtype), w3_ref[...],
                     preferred_element_type=jnp.float32) + b3_ref[...]
    out_ref[...] = logits.astype(out_ref.dtype)


def prepare_params(params, *, operand_dtype=jnp.bfloat16):
    """One-time preparation: pad all dims to multiples of 128 and cast weights.

    Call this ONCE per model and reuse the result for every forward call — it
    hoists the per-call pad/cast HLO ops out of the hot path.

    params: dict with w1 [F,H1], b1 [1,H1], w2 [H1,H2], b2 [1,H2], w3 [H2,C],
            b3 [1,C]  (weights already transposed to [in, out]).
    """
    F, H1 = params["w1"].shape
    H2 = params["w2"].shape[1]
    C = params["w3"].shape[1]
    Fp, H1p, H2p, Cp = (_round_up(d, 128) for d in (F, H1, H2, C))
    prepped = {
        "w1": _pad2(params["w1"], (Fp, H1p)).astype(operand_dtype),
        "w2": _pad2(params["w2"], (H1p, H2p)).astype(operand_dtype),
        "w3": _pad2(params["w3"], (H2p, Cp)).astype(operand_dtype),
        # biases stay f32 (bias-add happens on the f32 accumulator)
        "b1": _pad2(params["b1"], (1, H1p)).astype(jnp.float32),
        "b2": _pad2(params["b2"], (1, H2p)).astype(jnp.float32),
        "b3": _pad2(params["b3"], (1, Cp)).astype(jnp.float32),
        "dims": (F, H1, H2, C),
        "padded_dims": (Fp, H1p, H2p, Cp),
    }
    return prepped


def malware_detection_dnn_forward(x, prepped, *, batch_tile=512, smooth=False,
                                  out_dtype=jnp.float32,
                                  vmem_budget_bytes=40 * 2**20):
    """Fused MLP forward.  Returns PADDED logits of shape [Bp, Cp] (lane-dense,
    zero-padded columns >= n_classes); use `unpad_logits` if a dense
    [B, n_classes] array is required.

    x:        [B, F] (f32 or bf16; cast to the weight dtype inside the kernel)
    prepped:  output of prepare_params()
    out_dtype: logits dtype.  jnp.bfloat16 halves output HBM bytes (recommended
               on v6e where the large-batch regime is memory-bound).
    """
    B = x.shape[0]
    F, H1, H2, C = prepped["dims"]
    Fp, H1p, H2p, Cp = prepped["padded_dims"]
    assert x.shape[1] in (F, Fp), "x feature dim does not match prepared params"

    w1, b1 = prepped["w1"], prepped["b1"]
    w2, b2 = prepped["w2"], prepped["b2"]
    w3, b3 = prepped["w3"], prepped["b3"]

    op_isz = jnp.dtype(w1.dtype).itemsize
    out_isz = jnp.dtype(out_dtype).itemsize
    x_isz = jnp.dtype(x.dtype).itemsize

    # ---- VMEM accounting (conservative: Pallas double-buffers every block) ----
    const_bytes = 2 * ((Fp * H1p + H1p * H2p + H2p * Cp) * op_isz
                       + (H1p + H2p + Cp) * 4)
    per_row_bytes = (2 * Fp * x_isz          # x tile (double-buffered)
                     + 2 * Cp * out_isz      # out tile (double-buffered)
                     + (H1p + H2p + Cp) * 4)  # f32 intermediates
    avail = max(vmem_budget_bytes - const_bytes, 0)
    max_rows = max(8, (avail // max(per_row_bytes, 1)) // 8 * 8)
    # TODO(synk): if the weights themselves exceed the VMEM budget (Fp >~ 80k),
    # a K grid axis over Fp is required; not implemented.

    # ---- balanced batch tiling; >=2 tiles for B>256 so v7x uses both TCs ----
    num_tiles = max(_cdiv(B, batch_tile), 2 if B > 256 else 1)
    tile = _round_up(_cdiv(B, num_tiles), 8)
    tile = max(8, min(tile, max_rows))
    num_tiles = _cdiv(B, tile)
    Bp = num_tiles * tile

    # No cast here: zero copies if B and F are already aligned.
    xp = _pad2(x, (Bp, Fp))

    needed = const_bytes + tile * per_row_bytes
    vmem_limit = int(min(60 * 2**20, max(32 * 2**20, 2 * needed)))

    def full(shape):
        # weights/biases: constant block index -> DMA'd once, VMEM-resident.
        return pl.BlockSpec(shape, lambda i: (0, 0))

    kernel = functools.partial(_mlp_kernel, smooth=smooth)

    out = pl.pallas_call(
        kernel,
        out_shape=jax.ShapeDtypeStruct((Bp, Cp), out_dtype),
        grid_spec=pltpu.PrefetchScalarGridSpec(
            num_scalar_prefetch=0,
            grid=(num_tiles,),
            in_specs=[
                pl.BlockSpec((tile, Fp), lambda i: (i, 0)),   # x tile
                full((Fp, H1p)), full((1, H1p)),
                full((H1p, H2p)), full((1, H2p)),
                full((H2p, Cp)), full((1, Cp)),
            ],
            out_specs=pl.BlockSpec((tile, Cp), lambda i: (i, 0)),
        ),
        compiler_params=pltpu.CompilerParams(
            dimension_semantics=("parallel",),   # batch tiles shard across TCs
            vmem_limit_bytes=vmem_limit,
        ),
    )(xp, w1, b1, w2, b2, w3, b3)

    return out   # padded [Bp, Cp]; columns >= C are zero


def unpad_logits(padded_logits, batch_size, n_classes):
    """Optional: dense [B, n_classes] view for callers that need it."""
    return padded_logits[:batch_size, :n_classes]


def init_params(key, input_size, hidden_units, n_classes):
    """Deterministic init mimicking nn.Linear default U(-1/sqrt(fan_in), +)."""
    dims = [input_size] + list(hidden_units) + [n_classes]
    params = {}
    names = ["1", "2", "3"]
    for idx, (fan_in, fan_out) in enumerate(zip(dims[:-1], dims[1:])):
        key, kw, kb = jax.random.split(key, 3)
        bound = 1.0 / (fan_in ** 0.5)
        # stored as [in, out] (transposed vs torch) so kernel does x @ W
        params["w" + names[idx]] = jax.random.uniform(
            kw, (fan_in, fan_out), jnp.float32, minval=-bound, maxval=bound)
        params["b" + names[idx]] = jax.random.uniform(
            kb, (1, fan_out), jnp.float32, minval=-bound, maxval=bound)
    return params


def reference_forward(x, params, operand_dtype=jnp.float32, smooth=False):
    """Plain-JAX reference with the same operand quantization as the kernel."""
    def q(a):
        return a.astype(operand_dtype).astype(jnp.float32)

    h = _activation(
        jnp.dot(q(x), q(params["w1"]), preferred_element_type=jnp.float32)
        + params["b1"], smooth)
    h = _activation(
        jnp.dot(q(h), q(params["w2"]), preferred_element_type=jnp.float32)
        + params["b2"], smooth)
    return (jnp.dot(q(h), q(params["w3"]), preferred_element_type=jnp.float32)
            + params["b3"])


if __name__ == "__main__":
    key = jax.random.PRNGKey(0)

    batch = 8
    input_size = 256
    hidden_units = [200, 200]   # default dense_hidden_units
    n_classes = 2

    key, kx = jax.random.split(key)
    x = jax.random.normal(kx, (batch, input_size), dtype=jnp.float32)
    params = init_params(key, input_size, hidden_units, n_classes)

    # One-time preparation (hoisted out of the per-call hot path).
    prepped_bf16 = prepare_params(params)                              # default bf16
    prepped_f32 = prepare_params(params, operand_dtype=jnp.float32)    # strict parity

    # 1) Default bf16-operand path, tiny batch -> single grid step, f32 logits.
    out = jax.block_until_ready(malware_detection_dnn_forward(x, prepped_bf16))
    logits = unpad_logits(out, batch, n_classes)
    ref = reference_forward(x, params, operand_dtype=jnp.bfloat16)
    assert logits.shape == (batch, n_classes)
    assert jnp.allclose(logits, ref, atol=2e-3, rtol=2e-3), "bf16 path mismatch"

    # 2) Multi-tile grid path (3 grid steps) to exercise the batch index_map.
    key, kx2 = jax.random.split(key)
    x2 = jax.random.normal(kx2, (24, input_size), dtype=jnp.float32)
    out2 = jax.block_until_ready(
        malware_detection_dnn_forward(x2, prepped_bf16, batch_tile=8))
    ref2 = reference_forward(x2, params, operand_dtype=jnp.bfloat16)
    assert jnp.allclose(unpad_logits(out2, 24, n_classes), ref2,
                        atol=2e-3, rtol=2e-3), "tiled path mismatch"

    # 3) bf16 logits output (halves output HBM bytes; v6e recommendation).
    out3 = jax.block_until_ready(
        malware_detection_dnn_forward(x, prepped_bf16, out_dtype=jnp.bfloat16))
    assert jnp.allclose(unpad_logits(out3, batch, n_classes).astype(jnp.float32),
                        ref, atol=3e-2, rtol=3e-2), "bf16-output path mismatch"

    # 4) f32-operand strict-parity path against a pure-f32 reference.
    out4 = jax.block_until_ready(malware_detection_dnn_forward(x, prepped_f32))
    ref4 = reference_forward(x, params, operand_dtype=jnp.float32)
    assert jnp.allclose(unpad_logits(out4, batch, n_classes), ref4,
                        atol=2e-2, rtol=2e-2), "f32 path mismatch"

    # 5) smooth=True (SELU) activation variant.
    out5 = jax.block_until_ready(
        malware_detection_dnn_forward(x, prepped_bf16, smooth=True))
    ref5 = reference_forward(x, params, operand_dtype=jnp.bfloat16, smooth=True)
    assert jnp.allclose(unpad_logits(out5, batch, n_classes), ref5,
                        atol=5e-3, rtol=5e-3), "selu path mismatch"

    print("KERNEL_OK")
</pallas_src>

<mosaic_0001>
module attributes {stable_mosaic.version = 11 : i64} {
  func.func @_mlp_kernel(%arg0: i32, %arg1: memref<8x256xf32, #tpu.memory_space<vmem>>, %arg2: memref<256x256xbf16, #tpu.memory_space<vmem>>, %arg3: memref<1x256xf32, #tpu.memory_space<vmem>>, %arg4: memref<256x256xbf16, #tpu.memory_space<vmem>>, %arg5: memref<1x256xf32, #tpu.memory_space<vmem>>, %arg6: memref<256x128xbf16, #tpu.memory_space<vmem>>, %arg7: memref<1x128xf32, #tpu.memory_space<vmem>>, %arg8: memref<8x128xf32, #tpu.memory_space<vmem>>) attributes {dimension_semantics = [#tpu.dimension_semantics<parallel>], iteration_bounds = array<i64: 1>, scalar_prefetch = 0 : i64, scratch_operands = 0 : i64, tpu.core_type = #tpu.core_type<tc>, window_params = [{transform_indices = @transform_0, window_bounds = array<i64: 8, 256>}, {pipeline_mode = #tpu.pipeline_mode<synchronous>, transform_indices = @transform_1, window_bounds = array<i64: 256, 256>}, {pipeline_mode = #tpu.pipeline_mode<synchronous>, transform_indices = @transform_2, window_bounds = array<i64: 1, 256>}, {pipeline_mode = #tpu.pipeline_mode<synchronous>, transform_indices = @transform_3, window_bounds = array<i64: 256, 256>}, {pipeline_mode = #tpu.pipeline_mode<synchronous>, transform_indices = @transform_4, window_bounds = array<i64: 1, 256>}, {pipeline_mode = #tpu.pipeline_mode<synchronous>, transform_indices = @transform_5, window_bounds = array<i64: 256, 128>}, {pipeline_mode = #tpu.pipeline_mode<synchronous>, transform_indices = @transform_6, window_bounds = array<i64: 1, 128>}, {transform_indices = @transform_7, window_bounds = array<i64: 8, 128>}]} {
    %c0 = arith.constant 0 : index
    %c0_0 = arith.constant 0 : index
    %0 = vector.load %arg1[%c0, %c0_0] : memref<8x256xf32, #tpu.memory_space<vmem>>, vector<8x256xf32>
    %1 = arith.truncf %0 : vector<8x256xf32> to vector<8x256xbf16>
    %c0_1 = arith.constant 0 : index
    %c0_2 = arith.constant 0 : index
    %2 = vector.load %arg2[%c0_1, %c0_2] : memref<256x256xbf16, #tpu.memory_space<vmem>>, vector<256x256xbf16>
    %cst = arith.constant dense<0.000000e+00> : vector<8x256xf32>
    %3 = tpu.matmul %1, %2, %cst {dimension_numbers = #tpu.dot_dimension_numbers<[1], [0], [0], [1], [0, 0, 1, 1], [], []>} : vector<8x256xbf16>, vector<256x256xbf16>, vector<8x256xf32> -> vector<8x256xf32>
    %c0_3 = arith.constant 0 : index
    %c0_4 = arith.constant 0 : index
    %4 = vector.load %arg3[%c0_3, %c0_4] : memref<1x256xf32, #tpu.memory_space<vmem>>, vector<1x256xf32>
    %5 = vector.broadcast %4 : vector<1x256xf32> to vector<8x256xf32>
    %6 = arith.addf %3, %5 : vector<8x256xf32>
    %cst_5 = arith.constant 0.000000e+00 : f32
    %7 = vector.broadcast %cst_5 : f32 to vector<8x256xf32>
    %8 = arith.maximumf %6, %7 : vector<8x256xf32>
    %9 = arith.truncf %8 : vector<8x256xf32> to vector<8x256xbf16>
    %c0_6 = arith.constant 0 : index
    %c0_7 = arith.constant 0 : index
    %10 = vector.load %arg4[%c0_6, %c0_7] : memref<256x256xbf16, #tpu.memory_space<vmem>>, vector<256x256xbf16>
    %cst_8 = arith.constant dense<0.000000e+00> : vector<8x256xf32>
    %11 = tpu.matmul %9, %10, %cst_8 {dimension_numbers = #tpu.dot_dimension_numbers<[1], [0], [0], [1], [0, 0, 1, 1], [], []>} : vector<8x256xbf16>, vector<256x256xbf16>, vector<8x256xf32> -> vector<8x256xf32>
    %c0_9 = arith.constant 0 : index
    %c0_10 = arith.constant 0 : index
    %12 = vector.load %arg5[%c0_9, %c0_10] : memref<1x256xf32, #tpu.memory_space<vmem>>, vector<1x256xf32>
    %13 = vector.broadcast %12 : vector<1x256xf32> to vector<8x256xf32>
    %14 = arith.addf %11, %13 : vector<8x256xf32>
    %cst_11 = arith.constant 0.000000e+00 : f32
    %15 = vector.broadcast %cst_11 : f32 to vector<8x256xf32>
    %16 = arith.maximumf %14, %15 : vector<8x256xf32>
    %17 = arith.truncf %16 : vector<8x256xf32> to vector<8x256xbf16>
    %c0_12 = arith.constant 0 : index
    %c0_13 = arith.constant 0 : index
    %18 = vector.load %arg6[%c0_12, %c0_13] : memref<256x128xbf16, #tpu.memory_space<vmem>>, vector<256x128xbf16>
    %cst_14 = arith.constant dense<0.000000e+00> : vector<8x128xf32>
    %19 = tpu.matmul %17, %18, %cst_14 {dimension_numbers = #tpu.dot_dimension_numbers<[1], [0], [0], [1], [0, 0, 1, 1], [], []>} : vector<8x256xbf16>, vector<256x128xbf16>, vector<8x128xf32> -> vector<8x128xf32>
    %c0_15 = arith.constant 0 : index
    %c0_16 = arith.constant 0 : index
    %20 = vector.load %arg7[%c0_15, %c0_16] : memref<1x128xf32, #tpu.memory_space<vmem>>, vector<1x128xf32>
    %21 = vector.broadcast %20 : vector<1x128xf32> to vector<8x128xf32>
    %22 = arith.addf %19, %21 : vector<8x128xf32>
    %c0_17 = arith.constant 0 : index
    %c0_18 = arith.constant 0 : index
    %23 = vector.load %arg8[%c0_17, %c0_18] : memref<8x128xf32, #tpu.memory_space<vmem>>, vector<8x128xf32>
    tpu.vector_store %arg8[%c0_17, %c0_18], %22 {strides = array<i32>} : memref<8x128xf32, #tpu.memory_space<vmem>>, vector<8x128xf32>,
    return
  }
  func.func @transform_0(%arg0: i32) -> (i32, i32) {
    %c0_i32 = arith.constant 0 : i32
    %c0_i32_0 = arith.constant 0 : i32
    return %arg0, %c0_i32 : i32, i32
  }
  func.func @transform_1(%arg0: i32) -> (i32, i32) {
    %c0_i32 = arith.constant 0 : i32
    %c0_i32_0 = arith.constant 0 : i32
    %c0_i32_1 = arith.constant 0 : i32
    return %c0_i32, %c0_i32_0 : i32, i32
  }
  func.func @transform_2(%arg0: i32) -> (i32, i32) {
    %c0_i32 = arith.constant 0 : i32
    %c0_i32_0 = arith.constant 0 : i32
    %c0_i32_1 = arith.constant 0 : i32
    return %c0_i32, %c0_i32_0 : i32, i32
  }
  func.func @transform_3(%arg0: i32) -> (i32, i32) {
    %c0_i32 = arith.constant 0 : i32
    %c0_i32_0 = arith.constant 0 : i32
    %c0_i32_1 = arith.constant 0 : i32
    return %c0_i32, %c0_i32_0 : i32, i32
  }
  func.func @transform_4(%arg0: i32) -> (i32, i32) {
    %c0_i32 = arith.constant 0 : i32
    %c0_i32_0 = arith.constant 0 : i32
    %c0_i32_1 = arith.constant 0 : i32
    return %c0_i32, %c0_i32_0 : i32, i32
  }
  func.func @transform_5(%arg0: i32) -> (i32, i32) {
    %c0_i32 = arith.constant 0 : i32
    %c0_i32_0 = arith.constant 0 : i32
    %c0_i32_1 = arith.constant 0 : i32
    return %c0_i32, %c0_i32_0 : i32, i32
  }
  func.func @transform_6(%arg0: i32) -> (i32, i32) {
    %c0_i32 = arith.constant 0 : i32
    %c0_i32_0 = arith.constant 0 : i32
    %c0_i32_1 = arith.constant 0 : i32
    return %c0_i32, %c0_i32_0 : i32, i32
  }
  func.func @transform_7(%arg0: i32) -> (i32, i32) {
    %c0_i32 = arith.constant 0 : i32
    %c0_i32_0 = arith.constant 0 : i32
    return %arg0, %c0_i32 : i32, i32
  }
}

</mosaic_0001>

<llo_original>
// kernel: tpu_custom_call.1
$region0: #{tpu_custom_call.1}
  #allocation0 [shape = 'u32[]', space=smem, size = 0x4, offset = 0x4, fixed_abs, tag = 'smem constant byte address 0x4 - core index']
  #allocation1 [shape = 'u32[144,128]{1,0:T(1,128)}', space=vmem, size = 0x12000, scoped, tag = 'internal scratch']
  %s0 = inlined_call_operand.hbm [shape: f32[8,256], index: 0, kind: input, shape index: {}]
  %s1 = inlined_call_operand.hbm [shape: bf16[256,256], index: 1, kind: input, shape index: {}]
  %s2 = inlined_call_operand.vmem [shape: f32[1,256], index: 2, kind: input, shape index: {}]
  %s3 = inlined_call_operand.hbm [shape: bf16[256,256], index: 3, kind: input, shape index: {}]
  %s4 = inlined_call_operand.vmem [shape: f32[1,256], index: 4, kind: input, shape index: {}]
  %s5 = inlined_call_operand.hbm [shape: bf16[256,128], index: 5, kind: input, shape index: {}]
  %s6 = inlined_call_operand.vmem [shape: f32[1,128], index: 6, kind: input, shape index: {}]
  %s7 = inlined_call_operand.hbm [shape: f32[8,128], index: 7, kind: output, shape index: {}]
  %s8 = sld [smem:[#allocation0]]
  $region54: #{tpu_custom_call.1} parent=0
    _
  %s10 = ssub.s32 1, %s8
  %s11 = scalar_select 0, %s10, %s8
  $region1: #{tpu_custom_call.1} parent=0
    #allocation2 [shape = 'u8[8192]{0}', space=vmem, size = 0x2000, scoped, tag = 'input window, operand 0, single buffered']
    #allocation3 [shape = 's32[1]{0}', space=sflag, size = 0x4, scoped, tag = 'scoped memory for tpu_custom_call.1']
    #allocation4 [shape = 's32[1]{0}', space=sflag, size = 0x4, scoped, tag = 'scoped memory for tpu_custom_call.1']
    #allocation5 [shape = 'u8[131072]{0}', space=vmem, size = 0x20000, scoped, tag = 'input window, operand 1, single buffered']
    #allocation6 [shape = 's32[1]{0}', space=sflag, size = 0x4, scoped, tag = 'scoped memory for tpu_custom_call.1']
    #allocation7 [shape = 'u8[131072]{0}', space=vmem, size = 0x20000, scoped, tag = 'input window, operand 3, single buffered']
    #allocation8 [shape = 'u8[65536]{0}', space=vmem, size = 0x10000, scoped, tag = 'input window, operand 5, single buffered']
    #allocation9 [shape = 's32[1]{0}', space=sflag, size = 0x4, scoped, tag = 'scoped memory for tpu_custom_call.1']
    #allocation10 [shape = 'u8[4096]{0}', space=vmem, size = 0x1000, scoped, tag = 'output window, operand 0, single buffered']
    %12 = vsyncpa [#allocation3], 0
    %13 = vsyncpa [#allocation6], 0
    %14 = vsyncpa [#allocation9], 0
    %15 = vsyncpa [#allocation4], 0
    // Predicated region
    $region2: #{tpu_custom_call.1} parent=1 // pred_check
      _
    $region3: #{tpu_custom_call.1} parent=1 // pred_check_branch
      %17 = sbr.rel (0) target = $region5
    $region4: #{tpu_custom_call.1} parent=1 // pred_region
      %s19 = ssub.s32 256, 256
      %20 = vsyncadd [#allocation3], %s19
      %s22 = sshll.u32 [#allocation2], 4
      %s23 = int_to_ptr.vmem [resolvable:$true] %s22
      %25 = dma.hbm_to_vmem [thread:$0]  %s0, 256, %s23, [#allocation3]
    $region5: #{tpu_custom_call.1} parent=1 // pred_fallthru
      _
    // Predicated region
    $region6: #{tpu_custom_call.1} parent=1 // pred_check
      _
    $region7: #{tpu_custom_call.1} parent=1 // pred_check_branch
      %27 = sbr.rel (0) target = $region9
    $region8: #{tpu_custom_call.1} parent=1 // pred_region
      %s29 = ssub.s32 4096, 4096
      %30 = vsyncadd [#allocation6], %s29
      %s31 = sshll.u32 [#allocation5], 4
      %s32 = int_to_ptr.vmem [resolvable:$true] %s31
      %37 = dma.hbm_to_vmem [thread:$0]  %s1, 4096, %s32, [#allocation6], 128, 128, 8
    $region9: #{tpu_custom_call.1} parent=1 // pred_fallthru
      _
    // Predicated region
    $region10: #{tpu_custom_call.1} parent=1 // pred_check
      _
    $region11: #{tpu_custom_call.1} parent=1 // pred_check_branch
      %39 = sbr.rel (0) target = $region13
    $region12: #{tpu_custom_call.1} parent=1 // pred_region
      _
    $region13: #{tpu_custom_call.1} parent=1 // pred_fallthru
      _
    // Predicated region
    $region14: #{tpu_custom_call.1} parent=1 // pred_check
      _
    $region15: #{tpu_custom_call.1} parent=1 // pred_check_branch
      %41 = sbr.rel (0) target = $region17
    $region16: #{tpu_custom_call.1} parent=1 // pred_region
      %s43 = ssub.s32 4096, 4096
      %44 = vsyncadd [#allocation6], %s43
      %s45 = sshll.u32 [#allocation7], 4
      %s46 = int_to_ptr.vmem [resolvable:$true] %s45
      %51 = dma.hbm_to_vmem [thread:$0]  %s3, 4096, %s46, [#allocation6], 128, 128, 8
    $region17: #{tpu_custom_call.1} parent=1 // pred_fallthru
      _
    // Predicated region
    $region18: #{tpu_custom_call.1} parent=1 // pred_check
      _
    $region19: #{tpu_custom_call.1} parent=1 // pred_check_branch
      %53 = sbr.rel (0) target = $region21
    $region20: #{tpu_custom_call.1} parent=1 // pred_region
      _
    $region21: #{tpu_custom_call.1} parent=1 // pred_fallthru
      _
    // Predicated region
    $region22: #{tpu_custom_call.1} parent=1 // pred_check
      _
    $region23: #{tpu_custom_call.1} parent=1 // pred_check_branch
      %55 = sbr.rel (0) target = $region25
    $region24: #{tpu_custom_call.1} parent=1 // pred_region
      %s57 = ssub.s32 2048, 2048
      %58 = vsyncadd [#allocation9], %s57
      %s59 = sshll.u32 [#allocation8], 4
      %s60 = int_to_ptr.vmem [resolvable:$true] %s59
      %65 = dma.hbm_to_vmem [thread:$0]  %s5, 2048, %s60, [#allocation9], 64, 64, 4
    $region25: #{tpu_custom_call.1} parent=1 // pred_fallthru
      _
    // Predicated region
    $region26: #{tpu_custom_call.1} parent=1 // pred_check
      _
    $region27: #{tpu_custom_call.1} parent=1 // pred_check_branch
      %67 = sbr.rel (0) target = $region29
    $region28: #{tpu_custom_call.1} parent=1 // pred_region
      _
    $region29: #{tpu_custom_call.1} parent=1 // pred_fallthru
      _
    // Predicated region
    $region30: #{tpu_custom_call.1} parent=1 // pred_check
      _
    $region31: #{tpu_custom_call.1} parent=1 // pred_check_branch
      %69 = sbr.rel (0) target = $region33
    $region32: #{tpu_custom_call.1} parent=1 // pred_region
      %70 = dma.done [#allocation3], 256
    $region33: #{tpu_custom_call.1} parent=1 // pred_fallthru
      _
    // Predicated region
    $region34: #{tpu_custom_call.1} parent=1 // pred_check
      _
    $region35: #{tpu_custom_call.1} parent=1 // pred_check_branch
      %72 = sbr.rel (0) target = $region37
    $region36: #{tpu_custom_call.1} parent=1 // pred_region
      %73 = dma.done [#allocation6], 4096
    $region37: #{tpu_custom_call.1} parent=1 // pred_fallthru
      _
    // Predicated region
    $region38: #{tpu_custom_call.1} parent=1 // pred_check
      _
    $region39: #{tpu_custom_call.1} parent=1 // pred_check_branch
      %75 = sbr.rel (0) target = $region41
    $region40: #{tpu_custom_call.1} parent=1 // pred_region
      %76 = dma.done [#allocation6], 4096
    $region41: #{tpu_custom_call.1} parent=1 // pred_fallthru
      _
    // Predicated region
    $region42: #{tpu_custom_call.1} parent=1 // pred_check
      _
    $region43: #{tpu_custom_call.1} parent=1 // pred_check_branch
      %78 = sbr.rel (0) target = $region45
    $region44: #{tpu_custom_call.1} parent=1 // pred_region
      %79 = dma.done [#allocation9], 2048
    $region45: #{tpu_custom_call.1} parent=1 // pred_fallthru
      _
    %v81 = vld [vmem:[#allocation2] sm:$0xff]
    %v82 = vld [vmem:[#allocation2 + $0x8] sm:$0xff]
    %v83 = vpack.c.bf16 %v81, %v81
    %v84 = vpack.c.bf16 %v82, %v82
    %v85 = vld [vmem:[#allocation5] sm:$0xff]
    %v86 = vld [vmem:[#allocation5 + $0x8] sm:$0xff]
    %v87 = vld [vmem:[#allocation5 + $0x10] sm:$0xff]
    %v88 = vld [vmem:[#allocation5 + $0x18] sm:$0xff]
    %v89 = vld [vmem:[#allocation5 + $0x20] sm:$0xff]
    %v90 = vld [vmem:[#allocation5 + $0x28] sm:$0xff]
    %v91 = vld [vmem:[#allocation5 + $0x30] sm:$0xff]
    %v92 = vld [vmem:[#allocation5 + $0x38] sm:$0xff]
    %v93 = vld [vmem:[#allocation5 + $0x40] sm:$0xff]
    %v94 = vld [vmem:[#allocation5 + $0x48] sm:$0xff]
    %v95 = vld [vmem:[#allocation5 + $0x50] sm:$0xff]
    %v96 = vld [vmem:[#allocation5 + $0x58] sm:$0xff]
    %v97 = vld [vmem:[#allocation5 + $0x60] sm:$0xff]
    %v98 = vld [vmem:[#allocation5 + $0x68] sm:$0xff]
    %v99 = vld [vmem:[#allocation5 + $0x70] sm:$0xff]
    %v100 = vld [vmem:[#allocation5 + $0x78] sm:$0xff]
    %v101 = vld [vmem:[#allocation5 + $0x80] sm:$0xff]
    %v102 = vld [vmem:[#allocation5 + $0x88] sm:$0xff]
    %v103 = vld [vmem:[#allocation5 + $0x90] sm:$0xff]
    %v104 = vld [vmem:[#allocation5 + $0x98] sm:$0xff]
    %v105 = vld [vmem:[#allocation5 + $0xa0] sm:$0xff]
    %v106 = vld [vmem:[#allocation5 + $0xa8] sm:$0xff]
    %v107 = vld [vmem:[#allocation5 + $0xb0] sm:$0xff]
    %v108 = vld [vmem:[#allocation5 + $0xb8] sm:$0xff]
    %v109 = vld [vmem:[#allocation5 + $0xc0] sm:$0xff]
    %v110 = vld [vmem:[#allocation5 + $0xc8] sm:$0xff]
    %v111 = vld [vmem:[#allocation5 + $0xd0] sm:$0xff]
    %v112 = vld [vmem:[#allocation5 + $0xd8] sm:$0xff]
    %v113 = vld [vmem:[#allocation5 + $0xe0] sm:$0xff]
    %v114 = vld [vmem:[#allocation5 + $0xe8] sm:$0xff]
    %v115 = vld [vmem:[#allocation5 + $0xf0] sm:$0xff]
    %v116 = vld [vmem:[#allocation5 + $0xf8] sm:$0xff]
    %v117 = vld [vmem:[%s2] sm:$0x3]
    %v119 = vlaneseq
    %v120 = vshrl.u32 %v119, 7
    %v121 = vsub.s32 0, %v120
    %v122 = vrot.slane %v117, %v121
    %v123 = vlaneseq
    %v124 = vshrl.u32 %v123, 7
    %v125 = vsub.s32 1, %v124
    %v126 = vrot.slane %v117, %v125
    %v161 = vunpack.c.l.b16 %v85
    %v162 = vunpack.c.h.b16 %v85
    %v163 = vunpack.c.l.b16 %v86
    %v164 = vunpack.c.h.b16 %v86
    %v165 = vunpack.c.l.b16 %v87
    %v166 = vunpack.c.h.b16 %v87
    %v167 = vunpack.c.l.b16 %v88
    %v168 = vunpack.c.h.b16 %v88
    %v169 = vunpack.c.l.b16 %v89
    %v170 = vunpack.c.h.b16 %v89
    %v171 = vunpack.c.l.b16 %v90
    %v172 = vunpack.c.h.b16 %v90
    %v173 = vunpack.c.l.b16 %v91
    %v174 = vunpack.c.h.b16 %v91
    %v175 = vunpack.c.l.b16 %v92
    %v176 = vunpack.c.h.b16 %v92
    %v177 = vunpack.c.l.b16 %v93
    %v178 = vunpack.c.h.b16 %v93
    %v179 = vunpack.c.l.b16 %v94
    %v180 = vunpack.c.h.b16 %v94
    %v181 = vunpack.c.l.b16 %v95
    %v182 = vunpack.c.h.b16 %v95
    %v183 = vunpack.c.l.b16 %v96
    %v184 = vunpack.c.h.b16 %v96
    %v185 = vunpack.c.l.b16 %v97
    %v186 = vunpack.c.h.b16 %v97
    %v187 = vunpack.c.l.b16 %v98
    %v188 = vunpack.c.h.b16 %v98
    %v189 = vunpack.c.l.b16 %v99
    %v190 = vunpack.c.h.b16 %v99
    %v191 = vunpack.c.l.b16 %v100
    %v192 = vunpack.c.h.b16 %v100
    %v193 = vunpack.c.l.b16 %v101
    %v194 = vunpack.c.h.b16 %v101
    %v195 = vunpack.c.l.b16 %v102
    %v196 = vunpack.c.h.b16 %v102
    %v197 = vunpack.c.l.b16 %v103
    %v198 = vunpack.c.h.b16 %v103
    %v199 = vunpack.c.l.b16 %v104
    %v200 = vunpack.c.h.b16 %v104
    %v201 = vunpack.c.l.b16 %v105
    %v202 = vunpack.c.h.b16 %v105
    %v203 = vunpack.c.l.b16 %v106
    %v204 = vunpack.c.h.b16 %v106
    %v205 = vunpack.c.l.b16 %v107
    %v206 = vunpack.c.h.b16 %v107
    %v207 = vunpack.c.l.b16 %v108
    %v208 = vunpack.c.h.b16 %v108
    %v209 = vunpack.c.l.b16 %v109
    %v210 = vunpack.c.h.b16 %v109
    %v211 = vunpack.c.l.b16 %v110
    %v212 = vunpack.c.h.b16 %v110
    %v213 = vunpack.c.l.b16 %v111
    %v214 = vunpack.c.h.b16 %v111
    %v215 = vunpack.c.l.b16 %v112
    %v216 = vunpack.c.h.b16 %v112
    %v217 = vunpack.c.l.b16 %v113
    %v218 = vunpack.c.h.b16 %v113
    %v219 = vunpack.c.l.b16 %v114
    %v220 = vunpack.c.h.b16 %v114
    %v221 = vunpack.c.l.b16 %v115
    %v222 = vunpack.c.h.b16 %v115
    %v223 = vunpack.c.l.b16 %v116
    %v224 = vunpack.c.h.b16 %v116
    %v225 = vpack.c.b16 %v163, %v161
    %v226 = vpack.c.b16 %v164, %v162
    %v227 = vpack.c.b16 %v167, %v165
    %v228 = vpack.c.b16 %v168, %v166
    %v229 = vpack.c.b16 %v171, %v169
    %v230 = vpack.c.b16 %v172, %v170
    %v231 = vpack.c.b16 %v175, %v173
    %v232 = vpack.c.b16 %v176, %v174
    %v233 = vpack.c.b16 %v179, %v177
    %v234 = vpack.c.b16 %v180, %v178
    %v235 = vpack.c.b16 %v183, %v181
    %v236 = vpack.c.b16 %v184, %v182
    %v237 = vpack.c.b16 %v187, %v185
    %v238 = vpack.c.b16 %v188, %v186
    %v239 = vpack.c.b16 %v191, %v189
    %v240 = vpack.c.b16 %v192, %v190
    %v241 = vpack.c.b16 %v195, %v193
    %v242 = vpack.c.b16 %v196, %v194
    %v243 = vpack.c.b16 %v199, %v197
    %v244 = vpack.c.b16 %v200, %v198
    %v245 = vpack.c.b16 %v203, %v201
    %v246 = vpack.c.b16 %v204, %v202
    %v247 = vpack.c.b16 %v207, %v205
    %v248 = vpack.c.b16 %v208, %v206
    %v249 = vpack.c.b16 %v211, %v209
    %v250 = vpack.c.b16 %v212, %v210
    %v251 = vpack.c.b16 %v215, %v213
    %v252 = vpack.c.b16 %v216, %v214
    %v253 = vpack.c.b16 %v219, %v217
    %v254 = vpack.c.b16 %v220, %v218
    %v255 = vpack.c.b16 %v223, %v221
    %v256 = vpack.c.b16 %v224, %v222
    %289 = vmatprep.subr.bf16.mxu0 %v226
    %290 = vmatpush1.bf16.msra.mxu0 %v225
    %291 = vmatprep.subr.bf16.mxu0 %v228
    %292 = vmatpush1.bf16.msra.mxu0 %v227
    %293 = vmatprep.subr.bf16.mxu0 %v230
    %294 = vmatpush1.bf16.msra.mxu0 %v229
    %295 = vmatprep.subr.bf16.mxu0 %v232
    %296 = vmatpush1.bf16.msra.mxu0 %v231
    %297 = vmatprep.subr.bf16.mxu0 %v234
    %298 = vmatpush1.bf16.msra.mxu0 %v233
    %299 = vmatprep.subr.bf16.mxu0 %v236
    %300 = vmatpush1.bf16.msra.mxu0 %v235
    %301 = vmatprep.subr.bf16.mxu0 %v238
    %302 = vmatpush1.bf16.msra.mxu0 %v237
    %303 = vmatprep.subr.bf16.mxu0 %v240
    %304 = vmatpush1.bf16.msra.mxu0 %v239
    %305 = vmatprep.subr.bf16.mxu0 %v242
    %306 = vmatpush1.bf16.msra.mxu0 %v241
    %307 = vmatprep.subr.bf16.mxu0 %v244
    %308 = vmatpush1.bf16.msra.mxu0 %v243
    %309 = vmatprep.subr.bf16.mxu0 %v246
    %310 = vmatpush1.bf16.msra.mxu0 %v245
    %311 = vmatprep.subr.bf16.mxu0 %v248
    %312 = vmatpush1.bf16.msra.mxu0 %v247
    %313 = vmatprep.subr.bf16.mxu0 %v250
    %314 = vmatpush1.bf16.msra.mxu0 %v249
    %315 = vmatprep.subr.bf16.mxu0 %v252
    %316 = vmatpush1.bf16.msra.mxu0 %v251
    %317 = vmatprep.subr.bf16.mxu0 %v254
    %318 = vmatpush1.bf16.msra.mxu0 %v253
    %319 = vmatprep.subr.bf16.mxu0 %v256
    %320 = vmatpush1.bf16.msra.mxu0 %v255
    %321 = vmatprep.mubr.bf16.mxu0 %v84
    %322 = vmatmul.mubr.bf16.gmra.mrb[0].mxu0 %v83
    %v323 = vpop.f32.mrb[0].mxu0
    %v324 = vadd.f32 %v122, %v323
    %v325 = vpop.f32.mrb[0].mxu0
    %v326 = vadd.f32 %v126, %v325
    %v327 = vpop.f32.mrb[0].mxu0
    %v328 = vpop.f32.mrb[0].mxu0
    %329 = vdwg.mxu0
    %v330 = vmax.f32 %v324, 0.0
    %v331 = vmax.f32 %v326, 0.0
    %v332 = vpack.c.bf16 %v330, %v330
    %v333 = vpack.c.bf16 %v331, %v331
    %v334 = vld [vmem:[#allocation7] sm:$0xff]
    %v335 = vld [vmem:[#allocation7 + $0x8] sm:$0xff]
    %v336 = vld [vmem:[#allocation7 + $0x10] sm:$0xff]
    %v337 = vld [vmem:[#allocation7 + $0x18] sm:$0xff]
    %v338 = vld [vmem:[#allocation7 + $0x20] sm:$0xff]
    %v339 = vld [vmem:[#allocation7 + $0x28] sm:$0xff]
    %v340 = vld [vmem:[#allocation7 + $0x30] sm:$0xff]
    %v341 = vld [vmem:[#allocation7 + $0x38] sm:$0xff]
    %v342 = vld [vmem:[#allocation7 + $0x40] sm:$0xff]
    %v343 = vld [vmem:[#allocation7 + $0x48] sm:$0xff]
    %v344 = vld [vmem:[#allocation7 + $0x50] sm:$0xff]
    %v345 = vld [vmem:[#allocation7 + $0x58] sm:$0xff]
    %v346 = vld [vmem:[#allocation7 + $0x60] sm:$0xff]
    %v347 = vld [vmem:[#allocation7 + $0x68] sm:$0xff]
    %v348 = vld [vmem:[#allocation7 + $0x70] sm:$0xff]
    %v349 = vld [vmem:[#allocation7 + $0x78] sm:$0xff]
    %v350 = vld [vmem:[#allocation7 + $0x80] sm:$0xff]
    %v351 = vld [vmem:[#allocation7 + $0x88] sm:$0xff]
    %v352 = vld [vmem:[#allocation7 + $0x90] sm:$0xff]
    %v353 = vld [vmem:[#allocation7 + $0x98] sm:$0xff]
    %v354 = vld [vmem:[#allocation7 + $0xa0] sm:$0xff]
    %v355 = vld [vmem:[#allocation7 + $0xa8] sm:$0xff]
    %v356 = vld [vmem:[#allocation7 + $0xb0] sm:$0xff]
    %v357 = vld [vmem:[#allocation7 + $0xb8] sm:$0xff]
    %v358 = vld [vmem:[#allocation7 + $0xc0] sm:$0xff]
    %v359 = vld [vmem:[#allocation7 + $0xc8] sm:$0xff]
    %v360 = vld [vmem:[#allocation7 + $0xd0] sm:$0xff]
    %v361 = vld [vmem:[#allocation7 + $0xd8] sm:$0xff]
    %v362 = vld [vmem:[#allocation7 + $0xe0] sm:$0xff]
    %v363 = vld [vmem:[#allocation7 + $0xe8] sm:$0xff]
    %v364 = vld [vmem:[#allocation7 + $0xf0] sm:$0xff]
    %v365 = vld [vmem:[#allocation7 + $0xf8] sm:$0xff]
    %v366 = vld [vmem:[%s4] sm:$0x3]
    %v368 = vlaneseq
    %v369 = vshrl.u32 %v368, 7
    %v370 = vsub.s32 0, %v369
    %v371 = vrot.slane %v366, %v370
    %v372 = vlaneseq
    %v373 = vshrl.u32 %v372, 7
    %v374 = vsub.s32 1, %v373
    %v375 = vrot.slane %v366, %v374
    %v410 = vunpack.c.l.b16 %v334
    %v411 = vunpack.c.h.b16 %v334
    %v412 = vunpack.c.l.b16 %v335
    %v413 = vunpack.c.h.b16 %v335
    %v414 = vunpack.c.l.b16 %v336
    %v415 = vunpack.c.h.b16 %v336
    %v416 = vunpack.c.l.b16 %v337
    %v417 = vunpack.c.h.b16 %v337
    %v418 = vunpack.c.l.b16 %v338
    %v419 = vunpack.c.h.b16 %v338
    %v420 = vunpack.c.l.b16 %v339
    %v421 = vunpack.c.h.b16 %v339
    %v422 = vunpack.c.l.b16 %v340
    %v423 = vunpack.c.h.b16 %v340
    %v424 = vunpack.c.l.b16 %v341
    %v425 = vunpack.c.h.b16 %v341
    %v426 = vunpack.c.l.b16 %v342
    %v427 = vunpack.c.h.b16 %v342
    %v428 = vunpack.c.l.b16 %v343
    %v429 = vunpack.c.h.b16 %v343
    %v430 = vunpack.c.l.b16 %v344
    %v431 = vunpack.c.h.b16 %v344
    %v432 = vunpack.c.l.b16 %v345
    %v433 = vunpack.c.h.b16 %v345
    %v434 = vunpack.c.l.b16 %v346
    %v435 = vunpack.c.h.b16 %v346
    %v436 = vunpack.c.l.b16 %v347
    %v437 = vunpack.c.h.b16 %v347
    %v438 = vunpack.c.l.b16 %v348
    %v439 = vunpack.c.h.b16 %v348
    %v440 = vunpack.c.l.b16 %v349
    %v441 = vunpack.c.h.b16 %v349
    %v442 = vunpack.c.l.b16 %v350
    %v443 = vunpack.c.h.b16 %v350
    %v444 = vunpack.c.l.b16 %v351
    %v445 = vunpack.c.h.b16 %v351
    %v446 = vunpack.c.l.b16 %v352
    %v447 = vunpack.c.h.b16 %v352
    %v448 = vunpack.c.l.b16 %v353
    %v449 = vunpack.c.h.b16 %v353
    %v450 = vunpack.c.l.b16 %v354
    %v451 = vunpack.c.h.b16 %v354
    %v452 = vunpack.c.l.b16 %v355
    %v453 = vunpack.c.h.b16 %v355
    %v454 = vunpack.c.l.b16 %v356
    %v455 = vunpack.c.h.b16 %v356
    %v456 = vunpack.c.l.b16 %v357
    %v457 = vunpack.c.h.b16 %v357
    %v458 = vunpack.c.l.b16 %v358
    %v459 = vunpack.c.h.b16 %v358
    %v460 = vunpack.c.l.b16 %v359
    %v461 = vunpack.c.h.b16 %v359
    %v462 = vunpack.c.l.b16 %v360
    %v463 = vunpack.c.h.b16 %v360
    %v464 = vunpack.c.l.b16 %v361
    %v465 = vunpack.c.h.b16 %v361
    %v466 = vunpack.c.l.b16 %v362
    %v467 = vunpack.c.h.b16 %v362
    %v468 = vunpack.c.l.b16 %v363
    %v469 = vunpack.c.h.b16 %v363
    %v470 = vunpack.c.l.b16 %v364
    %v471 = vunpack.c.h.b16 %v364
    %v472 = vunpack.c.l.b16 %v365
    %v473 = vunpack.c.h.b16 %v365
    %v474 = vpack.c.b16 %v412, %v410
    %v475 = vpack.c.b16 %v413, %v411
    %v476 = vpack.c.b16 %v416, %v414
    %v477 = vpack.c.b16 %v417, %v415
    %v478 = vpack.c.b16 %v420, %v418
    %v479 = vpack.c.b16 %v421, %v419
    %v480 = vpack.c.b16 %v424, %v422
    %v481 = vpack.c.b16 %v425, %v423
    %v482 = vpack.c.b16 %v428, %v426
    %v483 = vpack.c.b16 %v429, %v427
    %v484 = vpack.c.b16 %v432, %v430
    %v485 = vpack.c.b16 %v433, %v431
    %v486 = vpack.c.b16 %v436, %v434
    %v487 = vpack.c.b16 %v437, %v435
    %v488 = vpack.c.b16 %v440, %v438
    %v489 = vpack.c.b16 %v441, %v439
    %v490 = vpack.c.b16 %v444, %v442
    %v491 = vpack.c.b16 %v445, %v443
    %v492 = vpack.c.b16 %v448, %v446
    %v493 = vpack.c.b16 %v449, %v447
    %v494 = vpack.c.b16 %v452, %v450
    %v495 = vpack.c.b16 %v453, %v451
    %v496 = vpack.c.b16 %v456, %v454
    %v497 = vpack.c.b16 %v457, %v455
    %v498 = vpack.c.b16 %v460, %v458
    %v499 = vpack.c.b16 %v461, %v459
    %v500 = vpack.c.b16 %v464, %v462
    %v501 = vpack.c.b16 %v465, %v463
    %v502 = vpack.c.b16 %v468, %v466
    %v503 = vpack.c.b16 %v469, %v467
    %v504 = vpack.c.b16 %v472, %v470
    %v505 = vpack.c.b16 %v473, %v471
    %538 = vmatprep.subr.bf16.mxu0 %v475
    %539 = vmatpush1.bf16.msra.mxu0 %v474
    %540 = vmatprep.subr.bf16.mxu0 %v477
    %541 = vmatpush1.bf16.msra.mxu0 %v476
    %542 = vmatprep.subr.bf16.mxu0 %v479
    %543 = vmatpush1.bf16.msra.mxu0 %v478
    %544 = vmatprep.subr.bf16.mxu0 %v481
    %545 = vmatpush1.bf16.msra.mxu0 %v480
    %546 = vmatprep.subr.bf16.mxu0 %v483
    %547 = vmatpush1.bf16.msra.mxu0 %v482
    %548 = vmatprep.subr.bf16.mxu0 %v485
    %549 = vmatpush1.bf16.msra.mxu0 %v484
    %550 = vmatprep.subr.bf16.mxu0 %v487
    %551 = vmatpush1.bf16.msra.mxu0 %v486
    %552 = vmatprep.subr.bf16.mxu0 %v489
    %553 = vmatpush1.bf16.msra.mxu0 %v488
    %554 = vmatprep.subr.bf16.mxu0 %v491
    %555 = vmatpush1.bf16.msra.mxu0 %v490
    %556 = vmatprep.subr.bf16.mxu0 %v493
    %557 = vmatpush1.bf16.msra.mxu0 %v492
    %558 = vmatprep.subr.bf16.mxu0 %v495
    %559 = vmatpush1.bf16.msra.mxu0 %v494
    %560 = vmatprep.subr.bf16.mxu0 %v497
    %561 = vmatpush1.bf16.msra.mxu0 %v496
    %562 = vmatprep.subr.bf16.mxu0 %v499
    %563 = vmatpush1.bf16.msra.mxu0 %v498
    %564 = vmatprep.subr.bf16.mxu0 %v501
    %565 = vmatpush1.bf16.msra.mxu0 %v500
    %566 = vmatprep.subr.bf16.mxu0 %v503
    %567 = vmatpush1.bf16.msra.mxu0 %v502
    %568 = vmatprep.subr.bf16.mxu0 %v505
    %569 = vmatpush1.bf16.msra.mxu0 %v504
    %570 = vmatprep.mubr.bf16.mxu0 %v333
    %571 = vmatmul.mubr.bf16.gmra.mrb[0].mxu0 %v332
    %v572 = vpop.f32.mrb[0].mxu0
    %v573 = vadd.f32 %v371, %v572
    %v574 = vpop.f32.mrb[0].mxu0
    %v575 = vadd.f32 %v375, %v574
    %v576 = vpop.f32.mrb[0].mxu0
    %v577 = vpop.f32.mrb[0].mxu0
    %578 = vdwg.mxu0
    %v579 = vmax.f32 %v573, 0.0
    %v580 = vmax.f32 %v575, 0.0
    %v581 = vpack.c.bf16 %v579, %v579
    %v582 = vpack.c.bf16 %v580, %v580
    %v583 = vld [vmem:[#allocation8] sm:$0xf]
    %v584 = vld [vmem:[#allocation8 + $0x4] sm:$0xf]
    %v585 = vld [vmem:[#allocation8 + $0x8] sm:$0xf]
    %v586 = vld [vmem:[#allocation8 + $0xc] sm:$0xf]
    %v587 = vld [vmem:[#allocation8 + $0x10] sm:$0xf]
    %v588 = vld [vmem:[#allocation8 + $0x14] sm:$0xf]
    %v589 = vld [vmem:[#allocation8 + $0x18] sm:$0xf]
    %v590 = vld [vmem:[#allocation8 + $0x1c] sm:$0xf]
    %v591 = vld [vmem:[#allocation8 + $0x20] sm:$0xf]
    %v592 = vld [vmem:[#allocation8 + $0x24] sm:$0xf]
    %v593 = vld [vmem:[#allocation8 + $0x28] sm:$0xf]
    %v594 = vld [vmem:[#allocation8 + $0x2c] sm:$0xf]
    %v595 = vld [vmem:[#allocation8 + $0x30] sm:$0xf]
    %v596 = vld [vmem:[#allocation8 + $0x34] sm:$0xf]
    %v597 = vld [vmem:[#allocation8 + $0x38] sm:$0xf]
    %v598 = vld [vmem:[#allocation8 + $0x3c] sm:$0xf]
    %v599 = vld [vmem:[#allocation8 + $0x40] sm:$0xf]
    %v600 = vld [vmem:[#allocation8 + $0x44] sm:$0xf]
    %v601 = vld [vmem:[#allocation8 + $0x48] sm:$0xf]
    %v602 = vld [vmem:[#allocation8 + $0x4c] sm:$0xf]
    %v603 = vld [vmem:[#allocation8 + $0x50] sm:$0xf]
    %v604 = vld [vmem:[#allocation8 + $0x54] sm:$0xf]
    %v605 = vld [vmem:[#allocation8 + $0x58] sm:$0xf]
    %v606 = vld [vmem:[#allocation8 + $0x5c] sm:$0xf]
    %v607 = vld [vmem:[#allocation8 + $0x60] sm:$0xf]
    %v608 = vld [vmem:[#allocation8 + $0x64] sm:$0xf]
    %v609 = vld [vmem:[#allocation8 + $0x68] sm:$0xf]
    %v610 = vld [vmem:[#allocation8 + $0x6c] sm:$0xf]
    %v611 = vld [vmem:[#allocation8 + $0x70] sm:$0xf]
    %v612 = vld [vmem:[#allocation8 + $0x74] sm:$0xf]
    %v613 = vld [vmem:[#allocation8 + $0x78] sm:$0xf]
    %v614 = vld [vmem:[#allocation8 + $0x7c] sm:$0xf]
    %v615 = vld [vmem:[%s6] sm:$0x1]
    %v617 = vlaneseq
    %v618 = vshrl.u32 %v617, 7
    %v619 = vsub.s32 0, %v618
    %v620 = vrot.slane %v615, %v619
    %v654 = vunpack.c.l.b16 %v583
    %v655 = vunpack.c.l.b16 %v584
    %v656 = vunpack.c.l.b16 %v585
    %v657 = vunpack.c.l.b16 %v586
    %v658 = vunpack.c.l.b16 %v587
    %v659 = vunpack.c.l.b16 %v588
    %v660 = vunpack.c.l.b16 %v589
    %v661 = vunpack.c.l.b16 %v590
    %v662 = vunpack.c.l.b16 %v591
    %v663 = vunpack.c.l.b16 %v592
    %v664 = vunpack.c.l.b16 %v593
    %v665 = vunpack.c.l.b16 %v594
    %v666 = vunpack.c.l.b16 %v595
    %v667 = vunpack.c.l.b16 %v596
    %v668 = vunpack.c.l.b16 %v597
    %v669 = vunpack.c.l.b16 %v598
    %v670 = vunpack.c.l.b16 %v599
    %v671 = vunpack.c.l.b16 %v600
    %v672 = vunpack.c.l.b16 %v601
    %v673 = vunpack.c.l.b16 %v602
    %v674 = vunpack.c.l.b16 %v603
    %v675 = vunpack.c.l.b16 %v604
    %v676 = vunpack.c.l.b16 %v605
    %v677 = vunpack.c.l.b16 %v606
    %v678 = vunpack.c.l.b16 %v607
    %v679 = vunpack.c.l.b16 %v608
    %v680 = vunpack.c.l.b16 %v609
    %v681 = vunpack.c.l.b16 %v610
    %v682 = vunpack.c.l.b16 %v611
    %v683 = vunpack.c.l.b16 %v612
    %v684 = vunpack.c.l.b16 %v613
    %v685 = vunpack.c.l.b16 %v614
    %v686 = vpack.c.b16 %v655, %v654
    %v687 = vpack.c.b16 %v657, %v656
    %v688 = vpack.c.b16 %v659, %v658
    %v689 = vpack.c.b16 %v661, %v660
    %v690 = vpack.c.b16 %v663, %v662
    %v691 = vpack.c.b16 %v665, %v664
    %v692 = vpack.c.b16 %v667, %v666
    %v693 = vpack.c.b16 %v669, %v668
    %v694 = vpack.c.b16 %v671, %v670
    %v695 = vpack.c.b16 %v673, %v672
    %v696 = vpack.c.b16 %v675, %v674
    %v697 = vpack.c.b16 %v677, %v676
    %v698 = vpack.c.b16 %v679, %v678
    %v699 = vpack.c.b16 %v681, %v680
    %v700 = vpack.c.b16 %v683, %v682
    %v701 = vpack.c.b16 %v685, %v684
    %718 = vmatprep.subr.bf16.mxu0 0
    %719 = vmatpush1.bf16.msra.mxu0 %v686
    %720 = vmatprep.subr.bf16.mxu0 0
    %721 = vmatpush1.bf16.msra.mxu0 %v687
    %722 = vmatprep.subr.bf16.mxu0 0
    %723 = vmatpush1.bf16.msra.mxu0 %v688
    %724 = vmatprep.subr.bf16.mxu0 0
    %725 = vmatpush1.bf16.msra.mxu0 %v689
    %726 = vmatprep.subr.bf16.mxu0 0
    %727 = vmatpush1.bf16.msra.mxu0 %v690
    %728 = vmatprep.subr.bf16.mxu0 0
    %729 = vmatpush1.bf16.msra.mxu0 %v691
    %730 = vmatprep.subr.bf16.mxu0 0
    %731 = vmatpush1.bf16.msra.mxu0 %v692
    %732 = vmatprep.subr.bf16.mxu0 0
    %733 = vmatpush1.bf16.msra.mxu0 %v693
    %734 = vmatprep.subr.bf16.mxu0 0
    %735 = vmatpush1.bf16.msra.mxu0 %v694
    %736 = vmatprep.subr.bf16.mxu0 0
    %737 = vmatpush1.bf16.msra.mxu0 %v695
    %738 = vmatprep.subr.bf16.mxu0 0
    %739 = vmatpush1.bf16.msra.mxu0 %v696
    %740 = vmatprep.subr.bf16.mxu0 0
    %741 = vmatpush1.bf16.msra.mxu0 %v697
    %742 = vmatprep.subr.bf16.mxu0 0
    %743 = vmatpush1.bf16.msra.mxu0 %v698
    %744 = vmatprep.subr.bf16.mxu0 0
    %745 = vmatpush1.bf16.msra.mxu0 %v699
    %746 = vmatprep.subr.bf16.mxu0 0
    %747 = vmatpush1.bf16.msra.mxu0 %v700
    %748 = vmatprep.subr.bf16.mxu0 0
    %749 = vmatpush1.bf16.msra.mxu0 %v701
    %750 = vmatprep.mubr.bf16.mxu0 %v582
    %751 = vmatmul.mubr.bf16.gmra.mrb[0].mxu0 %v581
    %v752 = vpop.f32.mrb[0].mxu0
    %v753 = vadd.f32 %v620, %v752
    %v754 = vpop.f32.mrb[0].mxu0
    %v755 = vpop.f32.mrb[0].mxu0
    %v756 = vpop.f32.mrb[0].mxu0
    %757 = vdwg.mxu0
    %758 = vst [vmem:[#allocation10] sm:$0xff] %v753
    // Predicated region
    $region46: #{tpu_custom_call.1} parent=1 // pred_check
      _
    $region47: #{tpu_custom_call.1} parent=1 // pred_check_branch
      %760 = sbr.rel (0) target = $region49
    $region48: #{tpu_custom_call.1} parent=1 // pred_region
      %s762 = ssub.s32 128, 128
      %763 = vsyncadd [#allocation4], %s762
      %s765 = sshll.u32 [#allocation10], 4
      %s766 = int_to_ptr.vmem [resolvable:$true] %s765
      %768 = dma.vmem_to_hbm [thread:$0]  %s766, 128, %s7, [#allocation4]
    $region49: #{tpu_custom_call.1} parent=1 // pred_fallthru
      _
    // Predicated region
    $region50: #{tpu_custom_call.1} parent=1 // pred_check
      _
    $region51: #{tpu_custom_call.1} parent=1 // pred_check_branch
      %770 = sbr.rel (0) target = $region53
    $region52: #{tpu_custom_call.1} parent=1 // pred_region
      %771 = dma.done [#allocation4], 128
    $region53: #{tpu_custom_call.1} parent=1 // pred_fallthru
      _
    %772 = vsyncpa [#allocation3], 1
    %773 = vsyncpa [#allocation6], 1
    %774 = vsyncpa [#allocation9], 1
    %775 = vsyncpa [#allocation4], 1

</llo_original>
